<compile_context>
chip_gen: v5e
topology: v5e:2x2
jax: 0.10.0
libtpu: 0.0.40
codegen_flags: <defaults>
</compile_context>

<pallas_src>
import math

import jax
import jax.numpy as jnp
from jax import lax
from jax.experimental import pallas as pl
from jax.experimental.pallas import tpu as pltpu


def _round_up(x, m):
    return ((x + m - 1) // m) * m


def _trailing_window_sum(pk, W):
    """Trailing-window (width W) sum along lanes via log-depth shift-and-add.

    Exact (no wraparound contamination) for every lane t >= W-1, which is all
    the downstream code consumes.  Each roll acts on the whole packed array,
    so series stacked on sublanes share every roll.
    """
    acc, acc_w = None, 0
    cur, cur_w = pk, 1
    b = int(W)
    while b > 0:
        if b & 1:
            if acc is None:
                acc, acc_w = cur, cur_w
            else:
                acc = acc + pltpu.roll(cur, shift=acc_w, axis=1)
                acc_w += cur_w
        b >>= 1
        if b > 0:
            cur = cur + pltpu.roll(cur, shift=cur_w, axis=1)
            cur_w *= 2
    return acc


def _make_loss_kernel(T, Tp, window_size, cost, corr_cost, sigma_scale):
    W = int(window_size)
    N = T - W + 1
    SQRT252 = math.sqrt(252.0)
    C = float(sigma_scale) / SQRT252            # fold sigma_scale / sqrt(252)

    def kernel(price_ref, weight_ref, bench_ref, out_ref, acc_ref):
        i = pl.program_id(0)

        @pl.when(i == 0)
        def _():
            acc_ref[...] = jnp.zeros_like(acc_ref)
            out_ref[...] = jnp.zeros_like(out_ref)

        price = price_ref[...]                                 # (BLK_A, Tp)
        w = weight_ref[...]                                    # (BLK_A, Tp)

        # 1/price: EUP approx reciprocal + one Newton step (≈ f32 accurate,
        # much cheaper than the lowered f32 divide chain).
        inv_p = pl.reciprocal(price, approx=True)
        inv_p = inv_p * (2.0 - price * inv_p)

        lane = lax.broadcasted_iota(jnp.int32, (1, Tp), 1)     # lanes-only mask
        prev_w = pltpu.roll(w, shift=1, axis=1)
        prev_w = jnp.where(lane == 0, 0.0, prev_w)             # weight[-1] := 0

        # gross pnl restructured so full-array rolls are 1-lane rotates:
        #   z[t]     = sum_a w[t-1,a] * price[t,a] / price[t-1,a]
        #   gross[t] = z[t+1] - sum_a w[t,a]      (the t+1 shift is applied
        #                                          later on the (1,Tp) vector)
        q = w * inv_p
        q_prev = pltpu.roll(q, shift=1, axis=1)  # lane-0 wraparound never consumed

        z_part = jnp.sum(q_prev * price, axis=0, keepdims=True)          # (1, Tp)
        turn_part = jnp.sum(jnp.abs(w - prev_w), axis=0, keepdims=True)  # (1, Tp)
        ws_part = jnp.sum(w, axis=0, keepdims=True)                      # (1, Tp)

        part = jnp.concatenate(
            [z_part, turn_part, ws_part, jnp.zeros((5, Tp), jnp.float32)],
            axis=0)                                                      # (8, Tp)
        acc_ref[...] = acc_ref[...] + part

        # -------------------- scalar tail: last asset block only ------------
        @pl.when(i == pl.num_programs(0) - 1)
        def _():
            acc = acc_ref[...]
            z = acc[0:1, :]
            turn = acc[1:2, :]
            ws = acc[2:3, :]
            bench = bench_ref[...]                              # (1, Tp)

            # gross[t] = z[t+1] - ws[t]; the Tp-1 roll is on a (1,Tp) vector.
            gross = pltpu.roll(z, shift=Tp - 1, axis=1) - ws
            raw = gross - cost * turn                           # daily pnl, lanes [0, T)

            day_mask = lane < T
            valid = (lane >= W - 1) & day_mask                  # the N tail days

            # ---- trailing-window (W) vol, ddof=1, on centred values --------
            mu = jnp.sum(jnp.where(day_mask, raw, 0.0), keepdims=True) * (1.0 / T)
            c = raw - mu                                        # variance is shift-invariant
            win = _trailing_window_sum(jnp.concatenate([c, c * c], axis=0), W)
            s1 = win[0:1, :]
            s2 = win[1:2, :]
            mean_c = s1 * (1.0 / W)
            var_w = (s2 - W * mean_c * mean_c) * (1.0 / (W - 1))
            inv_sd = lax.rsqrt(jnp.maximum(var_w, 1e-12))       # EUP rsqrt
            x = raw * (C * inv_sd)                              # return_df (lanes >= W-1)

            # ---- fused reductions, pass 1: means + |sum(w)-1| penalty ------
            vf = jnp.where(valid, 1.0, 0.0)
            dayf = jnp.where(day_mask, 1.0, 0.0)
            p1 = jnp.concatenate(
                [x * vf, bench * vf, jnp.abs(ws - 1.0) * dayf], axis=0)   # (3, Tp)
            r1 = jnp.sum(p1, axis=1, keepdims=True)                       # (3, 1)
            mx = r1[0:1, :] * (1.0 / N)
            my = r1[1:2, :] * (1.0 / N)
            loss3 = r1[2:3, :] * (1.0 / 1.25)

            # ---- fused reductions, pass 2: centred second moments ----------
            dx = (x - mx) * vf
            dy = (bench - my) * vf
            p2 = jnp.concatenate([dx * dy, dx * dx, dy * dy], axis=0)     # (3, Tp)
            r2 = jnp.sum(p2, axis=1, keepdims=True)                       # (3, 1)
            cov = r2[0:1, :]
            vx = r2[1:2, :]
            vy = r2[2:3, :]

            corr = jnp.abs(cov * lax.rsqrt(vx * vy + 1e-20))
            loss1 = -SQRT252 * mx * lax.rsqrt(vx * (1.0 / (N - 1)) + 1e-30)
            loss2 = corr_cost * corr
            out_ref[...] = (loss1 + loss2 + loss3).astype(jnp.float32)

    return kernel


def return_loss_adj(price, weight_df, benchmark, *, cost, corr_cost,
                    span=63, window_size=21, sigma_scale=0.15,
                    block_assets=256):
    """Pallas TPU implementation of ReturnLoss_adj.forward(weight_df)."""
    # TODO(synk): vol_adjreturn() lives outside the provided module; this uses a
    # documented synthetic version (simple-return P&L, linear turnover cost,
    # trailing-window vol targeting). The EWM `span` argument is unused.
    del span
    T, A = weight_df.shape
    assert price.shape == (T + 1, A) and benchmark.shape == (T, 1)
    W = int(window_size)
    assert 2 <= W <= T

    Tp = _round_up(T + 1, 128)
    blk_a = _round_up(min(int(block_assets), max(A, 8)), 8)
    Ap = _round_up(A, blk_a)
    num_blocks = Ap // blk_a

    # Time-on-lanes layout, padded so every block is a dense (8k, 128k) tile.
    price_r = jnp.ones((Ap, Tp), jnp.float32).at[:A, :T + 1].set(
        price.astype(jnp.float32).T)
    weight_r = jnp.zeros((Ap, Tp), jnp.float32).at[:A, :T].set(
        weight_df.astype(jnp.float32).T)
    bench_r = jnp.zeros((1, Tp), jnp.float32).at[:, :T].set(
        benchmark.astype(jnp.float32).T)

    kernel = _make_loss_kernel(T, Tp, W, float(cost), float(corr_cost),
                               float(sigma_scale))

    # Explicit scoped-VMEM budget from the actual block sizes (v5e's 16 MiB /
    # v7x's 32 MiB scoped defaults are otherwise the first thing to break):
    # 2 inputs x 2 pipeline buffers + in-kernel temporaries + small vectors.
    blk_bytes = blk_a * Tp * 4
    vmem_limit = (2 * 2 + 6) * blk_bytes + 6 * 8 * Tp * 4 + (2 << 20)
    vmem_limit = int(min(max(vmem_limit, 16 << 20), 48 << 20))

    cost_est = pl.CostEstimate(
        flops=12 * Ap * Tp,
        transcendentals=Ap * Tp,
        bytes_accessed=(2 * Ap * Tp + 4 * Tp) * 4,
    )

    # TODO(synk): on v7x the asset-reduction axis could be split across the two
    # TensorCores with per-core partial accumulators + a tiny epilogue.
    out = pl.pallas_call(
        kernel,
        out_shape=jax.ShapeDtypeStruct((1, 1), jnp.float32),
        grid=(num_blocks,),
        in_specs=[
            pl.BlockSpec((blk_a, Tp), lambda i: (i, 0)),
            pl.BlockSpec((blk_a, Tp), lambda i: (i, 0)),
            pl.BlockSpec((1, Tp), lambda i: (0, 0)),
        ],
        out_specs=pl.BlockSpec((1, 1), lambda i: (0, 0)),
        scratch_shapes=[pltpu.VMEM((8, Tp), jnp.float32)],
        compiler_params=pltpu.CompilerParams(
            dimension_semantics=("arbitrary",),
            vmem_limit_bytes=vmem_limit),
        cost_estimate=cost_est,
    )(price_r, weight_r, bench_r)
    return out[0, 0]


def return_loss_adj_ref(price, weight_df, benchmark, *, cost, corr_cost,
                        span=63, window_size=21, sigma_scale=0.15):
    """Pure-JAX reference mirroring the kernel math (for validation)."""
    del span
    T, A = weight_df.shape
    W = int(window_size)
    N = T - W + 1
    SQRT252 = math.sqrt(252.0)

    price = price.astype(jnp.float32)
    w = weight_df.astype(jnp.float32)
    bench = benchmark.astype(jnp.float32)

    ret = price[1:, :] / price[:-1, :] - 1.0
    prev_w = jnp.concatenate([jnp.zeros((1, A), jnp.float32), w[:-1, :]], axis=0)
    gross = jnp.sum(w * ret, axis=1, keepdims=True)
    turn = jnp.sum(jnp.abs(w - prev_w), axis=1, keepdims=True)
    raw = gross - cost * turn                                   # (T, 1)

    idx = jnp.arange(N)[:, None] + jnp.arange(W)[None, :]       # (N, W)
    windows = raw[idx, 0]                                       # (N, W)
    var_w = jnp.var(windows, axis=1, ddof=1, keepdims=True)
    sd_w = jnp.sqrt(jnp.maximum(var_w, 1e-12))
    x = raw[W - 1:, :] * sigma_scale / (sd_w * SQRT252)         # (N, 1)

    y = bench[W - 1:, :]
    mx = jnp.mean(x)
    my = jnp.mean(y)
    dx = x - mx
    dy = y - my
    cov = jnp.sum(dx * dy)
    vx = jnp.sum(dx * dx)
    vy = jnp.sum(dy * dy)
    corr = jnp.abs(cov / jnp.sqrt(vx * vy + 1e-20))

    std_x = jnp.sqrt(vx / (N - 1))
    loss1 = -SQRT252 * mx / std_x
    loss2 = corr_cost * corr
    loss3 = jnp.sum(jnp.abs(jnp.sum(w, axis=1, keepdims=True) - 1.0)) / 1.25
    return (loss1 + loss2 + loss3).astype(jnp.float32)


if __name__ == "__main__":
    key = jax.random.PRNGKey(0)
    T, A = 32, 8                      # days, num_asset (small, consistent shapes)
    window_size = 8
    span = 16
    cost = 0.001
    corr_cost = 0.5
    sigma_scale = 0.15

    k1, k2, k3 = jax.random.split(key, 3)
    # deterministic "module parameters": price path, benchmark return series
    log_ret = 0.01 * jax.random.normal(k1, (T + 1, A), dtype=jnp.float32)
    price = 100.0 * jnp.exp(jnp.cumsum(log_ret, axis=0))          # (T+1, A)
    benchmark = 0.01 * jax.random.normal(k3, (T, 1), dtype=jnp.float32)
    # forward input: weight_df
    weight_df = jax.random.uniform(k2, (T, A), dtype=jnp.float32,
                                   minval=0.0, maxval=0.25)       # (T, A)

    loss = return_loss_adj(price, weight_df, benchmark,
                           cost=cost, corr_cost=corr_cost, span=span,
                           window_size=window_size, sigma_scale=sigma_scale)
    loss = jax.block_until_ready(loss)

    ref = return_loss_adj_ref(price, weight_df, benchmark,
                              cost=cost, corr_cost=corr_cost, span=span,
                              window_size=window_size, sigma_scale=sigma_scale)

    assert bool(jnp.isfinite(loss)), "kernel produced non-finite loss"
    assert abs(float(loss) - float(ref)) <= 1e-2 * max(1.0, abs(float(ref))), (
        float(loss), float(ref))
    print("KERNEL_OK")
</pallas_src>

<mosaic_0001>
module attributes {stable_mosaic.version = 11 : i64} {
  func.func @kernel(%arg0: i32, %arg1: memref<8x128xf32, #tpu.memory_space<vmem>>, %arg2: memref<8x128xf32, #tpu.memory_space<vmem>>, %arg3: memref<1x128xf32, #tpu.memory_space<vmem>>, %arg4: memref<1x1xf32, #tpu.memory_space<vmem>>, %arg5: memref<8x128xf32, #tpu.memory_space<vmem>>) attributes {dimension_semantics = [#tpu.dimension_semantics<arbitrary>], iteration_bounds = array<i64: 1>, scalar_prefetch = 0 : i64, scratch_operands = 1 : i64, tpu.core_type = #tpu.core_type<tc>, window_params = [{transform_indices = @transform_0, window_bounds = array<i64: 8, 128>}, {transform_indices = @transform_1, window_bounds = array<i64: 8, 128>}, {pipeline_mode = #tpu.pipeline_mode<synchronous>, transform_indices = @transform_2, window_bounds = array<i64: 1, 128>}, {pipeline_mode = #tpu.pipeline_mode<synchronous>, transform_indices = @transform_3, window_bounds = array<i64: 1, 1>}]} {
    %c0_i32 = arith.constant 0 : i32
    %0 = arith.cmpi eq, %arg0, %c0_i32 : i32
    %1 = arith.extui %0 : i1 to i32
    %c0_i32_0 = arith.constant 0 : i32
    %2 = arith.cmpi ne, %1, %c0_i32_0 : i32
    scf.if %2 {
      %cst_17 = arith.constant 0.000000e+00 : f32
      %37 = vector.broadcast %cst_17 : f32 to vector<8x128xf32>
      %c0_18 = arith.constant 0 : index
      %c0_19 = arith.constant 0 : index
      %38 = vector.load %arg5[%c0_18, %c0_19] : memref<8x128xf32, #tpu.memory_space<vmem>>, vector<8x128xf32>
      tpu.vector_store %arg5[%c0_18, %c0_19], %37 {strides = array<i32>} : memref<8x128xf32, #tpu.memory_space<vmem>>, vector<8x128xf32>,
      %cst_20 = arith.constant 0.000000e+00 : f32
      %39 = vector.broadcast %cst_20 : f32 to vector<1x1xf32>
      %c0_21 = arith.constant 0 : index
      %c0_22 = arith.constant 0 : index
      %40 = vector.load %arg4[%c0_21, %c0_22] : memref<1x1xf32, #tpu.memory_space<vmem>>, vector<1x1xf32>
      tpu.vector_store %arg4[%c0_21, %c0_22], %39 {strides = array<i32>} : memref<1x1xf32, #tpu.memory_space<vmem>>, vector<1x1xf32>,
    } else {
    }
    %c0 = arith.constant 0 : index
    %c0_1 = arith.constant 0 : index
    %3 = vector.load %arg1[%c0, %c0_1] : memref<8x128xf32, #tpu.memory_space<vmem>>, vector<8x128xf32>
    %c0_2 = arith.constant 0 : index
    %c0_3 = arith.constant 0 : index
    %4 = vector.load %arg2[%c0_2, %c0_3] : memref<8x128xf32, #tpu.memory_space<vmem>>, vector<8x128xf32>
    %5 = tpu.reciprocal %3 {approx = true} : vector<8x128xf32> -> vector<8x128xf32>
    %6 = arith.mulf %3, %5 : vector<8x128xf32>
    %cst = arith.constant 2.000000e+00 : f32
    %7 = vector.broadcast %cst : f32 to vector<8x128xf32>
    %8 = arith.subf %7, %6 : vector<8x128xf32>
    %9 = arith.mulf %5, %8 : vector<8x128xf32>
    %10 = tpu.iota {dimensions = array<i32: 1>} : vector<1x128xi32>
    %c1_i32 = arith.constant 1 : i32
    %11 = tpu.dynamic_rotate %4 by %c1_i32 dim 1 : vector<8x128xf32>, i32 -> vector<8x128xf32>
    %c0_i32_4 = arith.constant 0 : i32
    %12 = vector.broadcast %c0_i32_4 : i32 to vector<1x128xi32>
    %13 = arith.cmpi eq, %10, %12 : vector<1x128xi32>
    %cst_5 = arith.constant 0.000000e+00 : f32
    %14 = vector.shape_cast %13 : vector<1x128xi1> to vector<1x128xi1>
    %15 = vector.broadcast %14 : vector<1x128xi1> to vector<8x128xi1>
    %16 = vector.broadcast %cst_5 : f32 to vector<8x128xf32>
    %17 = arith.select %15, %16, %11 : vector<8x128xi1>, vector<8x128xf32>
    %18 = arith.mulf %4, %9 : vector<8x128xf32>
    %c1_i32_6 = arith.constant 1 : i32
    %19 = tpu.dynamic_rotate %18 by %c1_i32_6 dim 1 : vector<8x128xf32>, i32 -> vector<8x128xf32>
    %20 = arith.mulf %19, %3 : vector<8x128xf32>
    %cst_7 = arith.constant dense<0.000000e+00> : vector<128xf32>
    %21 = vector.multi_reduction <add>, %20, %cst_7 [0] : vector<8x128xf32> to vector<128xf32>
    %22 = vector.shape_cast %21 : vector<128xf32> to vector<1x128xf32>
    %23 = arith.subf %4, %17 : vector<8x128xf32>
    %24 = math.absf %23 : vector<8x128xf32>
    %cst_8 = arith.constant dense<0.000000e+00> : vector<128xf32>
    %25 = vector.multi_reduction <add>, %24, %cst_8 [0] : vector<8x128xf32> to vector<128xf32>
    %26 = vector.shape_cast %25 : vector<128xf32> to vector<1x128xf32>
    %cst_9 = arith.constant dense<0.000000e+00> : vector<128xf32>
    %27 = vector.multi_reduction <add>, %4, %cst_9 [0] : vector<8x128xf32> to vector<128xf32>
    %28 = vector.shape_cast %27 : vector<128xf32> to vector<1x128xf32>
    %cst_10 = arith.constant 0.000000e+00 : f32
    %29 = vector.broadcast %cst_10 : f32 to vector<5x128xf32>
    %30 = tpu.concatenate %22, %26, %28, %29 in 0 : vector<1x128xf32>, vector<1x128xf32>, vector<1x128xf32>, vector<5x128xf32> -> vector<8x128xf32>
    %c0_11 = arith.constant 0 : index
    %c0_12 = arith.constant 0 : index
    %31 = vector.load %arg5[%c0_11, %c0_12] : memref<8x128xf32, #tpu.memory_space<vmem>>, vector<8x128xf32>
    %32 = arith.addf %31, %30 : vector<8x128xf32>
    %c0_13 = arith.constant 0 : index
    %c0_14 = arith.constant 0 : index
    %33 = vector.load %arg5[%c0_13, %c0_14] : memref<8x128xf32, #tpu.memory_space<vmem>>, vector<8x128xf32>
    tpu.vector_store %arg5[%c0_13, %c0_14], %32 {strides = array<i32>} : memref<8x128xf32, #tpu.memory_space<vmem>>, vector<8x128xf32>,
    %c0_i32_15 = arith.constant 0 : i32
    %34 = arith.cmpi eq, %arg0, %c0_i32_15 : i32
    %35 = arith.extui %34 : i1 to i32
    %c0_i32_16 = arith.constant 0 : i32
    %36 = arith.cmpi ne, %35, %c0_i32_16 : i32
    scf.if %36 {
      %c0_17 = arith.constant 0 : index
      %c0_18 = arith.constant 0 : index
      %37 = vector.load %arg5[%c0_17, %c0_18] : memref<8x128xf32, #tpu.memory_space<vmem>>, vector<8x128xf32>
      %38 = vector.extract_strided_slice %37 {offsets = [0, 0], sizes = [1, 128], strides = [1, 1]} : vector<8x128xf32> to vector<1x128xf32>
      %39 = vector.extract_strided_slice %37 {offsets = [1, 0], sizes = [1, 128], strides = [1, 1]} : vector<8x128xf32> to vector<1x128xf32>
      %40 = vector.extract_strided_slice %37 {offsets = [2, 0], sizes = [1, 128], strides = [1, 1]} : vector<8x128xf32> to vector<1x128xf32>
      %c0_19 = arith.constant 0 : index
      %c0_20 = arith.constant 0 : index
      %41 = vector.load %arg3[%c0_19, %c0_20] : memref<1x128xf32, #tpu.memory_space<vmem>>, vector<1x128xf32>
      %c127_i32 = arith.constant 127 : i32
      %42 = tpu.dynamic_rotate %38 by %c127_i32 dim 1 : vector<1x128xf32>, i32 -> vector<1x128xf32>
      %43 = arith.subf %42, %40 : vector<1x128xf32>
      %cst_21 = arith.constant 1.000000e-03 : f32
      %44 = vector.broadcast %cst_21 : f32 to vector<1x128xf32>
      %45 = arith.mulf %44, %39 : vector<1x128xf32>
      %46 = arith.subf %43, %45 : vector<1x128xf32>
      %c32_i32 = arith.constant 32 : i32
      %47 = vector.broadcast %c32_i32 : i32 to vector<1x128xi32>
      %48 = arith.cmpi slt, %10, %47 : vector<1x128xi32>
      %c7_i32 = arith.constant 7 : i32
      %49 = vector.broadcast %c7_i32 : i32 to vector<1x128xi32>
      %50 = arith.cmpi sge, %10, %49 : vector<1x128xi32>
      %51 = arith.andi %50, %48 : vector<1x128xi1>
      %cst_22 = arith.constant 0.000000e+00 : f32
      %52 = vector.broadcast %cst_22 : f32 to vector<1x128xf32>
      %53 = arith.select %48, %46, %52 : vector<1x128xi1>, vector<1x128xf32>
      %54 = vector.shape_cast %53 : vector<1x128xf32> to vector<1x1x128xf32>
      %cst_23 = arith.constant dense<0.000000e+00> : vector<1xf32>
      %55 = vector.multi_reduction <add>, %54, %cst_23 [1, 2] : vector<1x1x128xf32> to vector<1xf32>
      %56 = vector.shape_cast %55 : vector<1xf32> to vector<1x1x1xf32>
      %57 = vector.extract %56[0, 0, 0] : f32 from vector<1x1x1xf32>
      %58 = vector.broadcast %57 : f32 to vector<1x1xf32>
      %cst_24 = arith.constant 3.125000e-02 : f32
      %59 = vector.broadcast %cst_24 : f32 to vector<1x1xf32>
      %60 = arith.mulf %58, %59 : vector<1x1xf32>
      %61 = vector.broadcast %60 : vector<1x1xf32> to vector<1x128xf32>
      %62 = arith.subf %46, %61 : vector<1x128xf32>
      %63 = arith.mulf %62, %62 : vector<1x128xf32>
      %64 = tpu.concatenate %62, %63 in 0 : vector<1x128xf32>, vector<1x128xf32> -> vector<2x128xf32>
      %c1_i32_25 = arith.constant 1 : i32
      %65 = tpu.dynamic_rotate %64 by %c1_i32_25 dim 1 : vector<2x128xf32>, i32 -> vector<2x128xf32>
      %66 = arith.addf %64, %65 : vector<2x128xf32>
      %c2_i32 = arith.constant 2 : i32
      %67 = tpu.dynamic_rotate %66 by %c2_i32 dim 1 : vector<2x128xf32>, i32 -> vector<2x128xf32>
      %68 = arith.addf %66, %67 : vector<2x128xf32>
      %c4_i32 = arith.constant 4 : i32
      %69 = tpu.dynamic_rotate %68 by %c4_i32 dim 1 : vector<2x128xf32>, i32 -> vector<2x128xf32>
      %70 = arith.addf %68, %69 : vector<2x128xf32>
      %71 = vector.extract_strided_slice %70 {offsets = [0, 0], sizes = [1, 128], strides = [1, 1]} : vector<2x128xf32> to vector<1x128xf32>
      %72 = vector.extract_strided_slice %70 {offsets = [1, 0], sizes = [1, 128], strides = [1, 1]} : vector<2x128xf32> to vector<1x128xf32>
      %cst_26 = arith.constant 1.250000e-01 : f32
      %73 = vector.broadcast %cst_26 : f32 to vector<1x128xf32>
      %74 = arith.mulf %71, %73 : vector<1x128xf32>
      %cst_27 = arith.constant 8.000000e+00 : f32
      %75 = vector.broadcast %cst_27 : f32 to vector<1x128xf32>
      %76 = arith.mulf %75, %74 : vector<1x128xf32>
      %77 = arith.mulf %76, %74 : vector<1x128xf32>
      %78 = arith.subf %72, %77 : vector<1x128xf32>
      %cst_28 = arith.constant 0.142857149 : f32
      %79 = vector.broadcast %cst_28 : f32 to vector<1x128xf32>
      %80 = arith.mulf %78, %79 : vector<1x128xf32>
      %cst_29 = arith.constant 9.99999996E-13 : f32
      %81 = vector.broadcast %cst_29 : f32 to vector<1x128xf32>
      %82 = arith.maximumf %80, %81 : vector<1x128xf32>
      %83 = math.rsqrt %82 : vector<1x128xf32>
      %cst_30 = arith.constant 0.00944911223 : f32
      %84 = vector.broadcast %cst_30 : f32 to vector<1x128xf32>
      %85 = arith.mulf %84, %83 : vector<1x128xf32>
      %86 = arith.mulf %46, %85 : vector<1x128xf32>
      %cst_31 = arith.constant 1.000000e+00 : f32
      %cst_32 = arith.constant 0.000000e+00 : f32
      %87 = vector.broadcast %cst_31 : f32 to vector<1x128xf32>
      %88 = vector.broadcast %cst_32 : f32 to vector<1x128xf32>
      %89 = arith.select %51, %87, %88 : vector<1x128xi1>, vector<1x128xf32>
      %cst_33 = arith.constant 1.000000e+00 : f32
      %cst_34 = arith.constant 0.000000e+00 : f32
      %90 = vector.broadcast %cst_33 : f32 to vector<1x128xf32>
      %91 = vector.broadcast %cst_34 : f32 to vector<1x128xf32>
      %92 = arith.select %48, %90, %91 : vector<1x128xi1>, vector<1x128xf32>
      %93 = arith.mulf %86, %89 : vector<1x128xf32>
      %94 = arith.mulf %41, %89 : vector<1x128xf32>
      %cst_35 = arith.constant 1.000000e+00 : f32
      %95 = vector.broadcast %cst_35 : f32 to vector<1x128xf32>
      %96 = arith.subf %40, %95 : vector<1x128xf32>
      %97 = math.absf %96 : vector<1x128xf32>
      %98 = arith.mulf %97, %92 : vector<1x128xf32>
      %99 = tpu.concatenate %93, %94, %98 in 0 : vector<1x128xf32>, vector<1x128xf32>, vector<1x128xf32> -> vector<3x128xf32>
      %cst_36 = arith.constant dense<0.000000e+00> : vector<3xf32>
      %100 = vector.multi_reduction <add>, %99, %cst_36 [1] : vector<3x128xf32> to vector<3xf32>
      %101 = vector.shape_cast %100 : vector<3xf32> to vector<3x1xf32>
      %102 = vector.extract_strided_slice %101 {offsets = [0, 0], sizes = [1, 1], strides = [1, 1]} : vector<3x1xf32> to vector<1x1xf32>
      %cst_37 = arith.constant 4.000000e-02 : f32
      %103 = vector.broadcast %cst_37 : f32 to vector<1x1xf32>
      %104 = arith.mulf %102, %103 : vector<1x1xf32>
      %105 = vector.extract_strided_slice %101 {offsets = [1, 0], sizes = [1, 1], strides = [1, 1]} : vector<3x1xf32> to vector<1x1xf32>
      %cst_38 = arith.constant 4.000000e-02 : f32
      %106 = vector.broadcast %cst_38 : f32 to vector<1x1xf32>
      %107 = arith.mulf %105, %106 : vector<1x1xf32>
      %108 = vector.extract_strided_slice %101 {offsets = [2, 0], sizes = [1, 1], strides = [1, 1]} : vector<3x1xf32> to vector<1x1xf32>
      %cst_39 = arith.constant 8.000000e-01 : f32
      %109 = vector.broadcast %cst_39 : f32 to vector<1x1xf32>
      %110 = arith.mulf %108, %109 : vector<1x1xf32>
      %111 = vector.broadcast %104 : vector<1x1xf32> to vector<1x128xf32>
      %112 = arith.subf %86, %111 : vector<1x128xf32>
      %113 = arith.mulf %112, %89 : vector<1x128xf32>
      %114 = vector.broadcast %107 : vector<1x1xf32> to vector<1x128xf32>
      %115 = arith.subf %41, %114 : vector<1x128xf32>
      %116 = arith.mulf %115, %89 : vector<1x128xf32>
      %117 = arith.mulf %113, %116 : vector<1x128xf32>
      %118 = arith.mulf %113, %113 : vector<1x128xf32>
      %119 = arith.mulf %116, %116 : vector<1x128xf32>
      %120 = tpu.concatenate %117, %118, %119 in 0 : vector<1x128xf32>, vector<1x128xf32>, vector<1x128xf32> -> vector<3x128xf32>
      %cst_40 = arith.constant dense<0.000000e+00> : vector<3xf32>
      %121 = vector.multi_reduction <add>, %120, %cst_40 [1] : vector<3x128xf32> to vector<3xf32>
      %122 = vector.shape_cast %121 : vector<3xf32> to vector<3x1xf32>
      %123 = vector.extract_strided_slice %122 {offsets = [0, 0], sizes = [1, 1], strides = [1, 1]} : vector<3x1xf32> to vector<1x1xf32>
      %124 = vector.extract_strided_slice %122 {offsets = [1, 0], sizes = [1, 1], strides = [1, 1]} : vector<3x1xf32> to vector<1x1xf32>
      %125 = vector.extract_strided_slice %122 {offsets = [2, 0], sizes = [1, 1], strides = [1, 1]} : vector<3x1xf32> to vector<1x1xf32>
      %126 = arith.mulf %124, %125 : vector<1x1xf32>
      %cst_41 = arith.constant 9.99999968E-21 : f32
      %127 = vector.broadcast %cst_41 : f32 to vector<1x1xf32>
      %128 = arith.addf %126, %127 : vector<1x1xf32>
      %129 = math.rsqrt %128 : vector<1x1xf32>
      %130 = arith.mulf %123, %129 : vector<1x1xf32>
      %131 = math.absf %130 : vector<1x1xf32>
      %cst_42 = arith.constant -15.8745079 : f32
      %132 = vector.broadcast %cst_42 : f32 to vector<1x1xf32>
      %133 = arith.mulf %132, %104 : vector<1x1xf32>
      %cst_43 = arith.constant 0.0416666679 : f32
      %134 = vector.broadcast %cst_43 : f32 to vector<1x1xf32>
      %135 = arith.mulf %124, %134 : vector<1x1xf32>
      %cst_44 = arith.constant 1.000000e-30 : f32
      %136 = vector.broadcast %cst_44 : f32 to vector<1x1xf32>
      %137 = arith.addf %135, %136 : vector<1x1xf32>
      %138 = math.rsqrt %137 : vector<1x1xf32>
      %139 = arith.mulf %133, %138 : vector<1x1xf32>
      %cst_45 = arith.constant 5.000000e-01 : f32
      %140 = vector.broadcast %cst_45 : f32 to vector<1x1xf32>
      %141 = arith.mulf %140, %131 : vector<1x1xf32>
      %142 = arith.addf %139, %141 : vector<1x1xf32>
      %143 = arith.addf %142, %110 : vector<1x1xf32>
      %c0_46 = arith.constant 0 : index
      %c0_47 = arith.constant 0 : index
      %144 = vector.load %arg4[%c0_46, %c0_47] : memref<1x1xf32, #tpu.memory_space<vmem>>, vector<1x1xf32>
      tpu.vector_store %arg4[%c0_46, %c0_47], %143 {strides = array<i32>} : memref<1x1xf32, #tpu.memory_space<vmem>>, vector<1x1xf32>,
    } else {
    }
    return
  }
  func.func @transform_0(%arg0: i32) -> (i32, i32) {
    %c0_i32 = arith.constant 0 : i32
    %c0_i32_0 = arith.constant 0 : i32
    return %arg0, %c0_i32 : i32, i32
  }
  func.func @transform_1(%arg0: i32) -> (i32, i32) {
    %c0_i32 = arith.constant 0 : i32
    %c0_i32_0 = arith.constant 0 : i32
    return %arg0, %c0_i32 : i32, i32
  }
  func.func @transform_2(%arg0: i32) -> (i32, i32) {
    %c0_i32 = arith.constant 0 : i32
    %c0_i32_0 = arith.constant 0 : i32
    %c0_i32_1 = arith.constant 0 : i32
    return %c0_i32, %c0_i32_0 : i32, i32
  }
  func.func @transform_3(%arg0: i32) -> (i32, i32) {
    %c0_i32 = arith.constant 0 : i32
    %c0_i32_0 = arith.constant 0 : i32
    %c0_i32_1 = arith.constant 0 : i32
    return %c0_i32, %c0_i32_0 : i32, i32
  }
}

</mosaic_0001>

<llo_original>
// kernel: tpu_custom_call.1
$region0: #{tpu_custom_call.1}
  #allocation0 [shape = 'u32[]', space=smem, size = 0x4, offset = 0x4, fixed_abs, tag = 'smem constant byte address 0x4 - core index']
  #allocation1 [shape = 'u32[72,128]{1,0:T(1,128)}', space=vmem, size = 0x9000, scoped, tag = 'internal scratch']
  #allocation2 [shape = 'f32[8,128]{1,0:T(8,128)}', space=vmem, size = 0x1000, scoped, tag = 'scratch operand']
  %s0 = inlined_call_operand.hbm [shape: f32[8,128], index: 0, kind: input, shape index: {}]
  %s1 = inlined_call_operand.hbm [shape: f32[8,128], index: 1, kind: input, shape index: {}]
  %s2 = inlined_call_operand.vmem [shape: f32[1,128], index: 2, kind: input, shape index: {}]
  %s3 = inlined_call_operand.hbm [shape: f32[1,1], index: 3, kind: output, shape index: {}]
  %s4 = sld [smem:[#allocation0]]
  $region38: #{tpu_custom_call.1} parent=0
    _
  %s6 = ssub.s32 1, %s4
  %s7 = scalar_select 0, %s6, %s4
  $region1: #{tpu_custom_call.1} parent=0
    #allocation3 [shape = 'u8[4096]{0}', space=vmem, size = 0x1000, scoped, tag = 'input window, operand 0, single buffered']
    #allocation4 [shape = 's32[1]{0}', space=sflag, size = 0x4, scoped, tag = 'scoped memory for tpu_custom_call.1']
    #allocation5 [shape = 's32[1]{0}', space=sflag, size = 0x4, scoped, tag = 'scoped memory for tpu_custom_call.1']
    #allocation6 [shape = 'u8[4096]{0}', space=vmem, size = 0x1000, scoped, tag = 'input window, operand 1, single buffered']
    #allocation7 [shape = 's32[1]{0}', space=sflag, size = 0x4, scoped, tag = 'scoped memory for tpu_custom_call.1']
    #allocation8 [shape = 'u8[512]{0}', space=vmem, size = 0x400, scoped, tag = 'output window, operand 0, single buffered']
    %8 = vsyncpa [#allocation4], 0
    %9 = vsyncpa [#allocation7], 0
    %10 = vsyncpa [#allocation5], 0
    // Predicated region
    $region2: #{tpu_custom_call.1} parent=1 // pred_check
      _
    $region3: #{tpu_custom_call.1} parent=1 // pred_check_branch
      %12 = sbr.rel (0) target = $region5
    $region4: #{tpu_custom_call.1} parent=1 // pred_region
      %14 = vsyncadd [#allocation4], 0
      %s16 = sshll.u32 %s0, 4
      %s17 = int_to_ptr.hbm [resolvable:$true] %s16
      %s18 = sshll.u32 [#allocation3], 4
      %s19 = int_to_ptr.vmem [resolvable:$true] %s18
      %21 = dma.hbm_to_vmem [thread:$0]  %s17, 128, %s19, [#allocation4]
    $region5: #{tpu_custom_call.1} parent=1 // pred_fallthru
      _
    // Predicated region
    $region6: #{tpu_custom_call.1} parent=1 // pred_check
      _
    $region7: #{tpu_custom_call.1} parent=1 // pred_check_branch
      %23 = sbr.rel (0) target = $region9
    $region8: #{tpu_custom_call.1} parent=1 // pred_region
      %25 = vsyncadd [#allocation7], 0
      %s27 = sshll.u32 %s1, 4
      %s28 = int_to_ptr.hbm [resolvable:$true] %s27
      %s29 = sshll.u32 [#allocation6], 4
      %s30 = int_to_ptr.vmem [resolvable:$true] %s29
      %32 = dma.hbm_to_vmem [thread:$0]  %s28, 128, %s30, [#allocation7]
    $region9: #{tpu_custom_call.1} parent=1 // pred_fallthru
      _
    // Predicated region
    $region10: #{tpu_custom_call.1} parent=1 // pred_check
      _
    $region11: #{tpu_custom_call.1} parent=1 // pred_check_branch
      %34 = sbr.rel (0) target = $region13
    $region12: #{tpu_custom_call.1} parent=1 // pred_region
      _
    $region13: #{tpu_custom_call.1} parent=1 // pred_fallthru
      _
    // Predicated region
    $region14: #{tpu_custom_call.1} parent=1 // pred_check
      _
    $region15: #{tpu_custom_call.1} parent=1 // pred_check_branch
      %36 = sbr.rel (0) target = $region17
    $region16: #{tpu_custom_call.1} parent=1 // pred_region
      %38 = dma.done [#allocation4], 128
    $region17: #{tpu_custom_call.1} parent=1 // pred_fallthru
      _
    // Predicated region
    $region18: #{tpu_custom_call.1} parent=1 // pred_check
      _
    $region19: #{tpu_custom_call.1} parent=1 // pred_check_branch
      %40 = sbr.rel (0) target = $region21
    $region20: #{tpu_custom_call.1} parent=1 // pred_region
      %42 = dma.done [#allocation7], 128
    $region21: #{tpu_custom_call.1} parent=1 // pred_fallthru
      _
    %p43 = scmp.eq.s32.totalorder 0, 0
    // Predicated region
    $region22: #{tpu_custom_call.1} parent=1 // pred_check
      %p44 = pneg %p43
    $region23: #{tpu_custom_call.1} parent=1 // pred_check_branch
      %46 = sbr.rel (%p44) target = $region25
    $region24: #{tpu_custom_call.1} parent=1 // pred_region
      %47 = vst [vmem:[#allocation2] sm:$0xff] 0.0
      %vm48 = vcmask 0
      %49 = vst.msk [vmem:[#allocation8] sm:$0x1] %vm48, 0.0
    $region25: #{tpu_custom_call.1} parent=1 // pred_fallthru
      _
    %v50 = vld [vmem:[#allocation3] sm:$0xff]
    %v51 = vld [vmem:[#allocation6] sm:$0xff]
    %v52 = vrcp.pop %v50
    %v53 = vmul.f32 %v50, %v52
    %v54 = vsub.f32 2.0, %v53
    %v55 = vmul.f32 %v52, %v54
    %v56 = vlaneseq
    %v57 = vand.u32 %v56, 127
    %58 = vrot.lane.b32.xlu0 %v51, 1
    %v59 = vpop.permute.xlu0 %58
    %vm60 = vcmp.eq.s32.totalorder %v57, 0
    %v61 = vsel %vm60, 1, 0
    %vm62 = vcmp.eq.s32.totalorder %v61, 1
    %v63 = vsel %vm62, 0.0, %v59
    %v64 = vmul.f32 %v51, %v55
    %65 = vrot.lane.b32.xlu0 %v64, 1
    %v66 = vpop.permute.xlu0 %65
    %v67 = vmul.f32 %v66, %v50
    %v68 = vrot.slane %v67, 4
    %v69 = vadd.f32 %v67, %v68
    %v70 = vrot.slane %v69, 2
    %v71 = vadd.f32 %v69, %v70
    %v72 = vrot.slane %v71, 1
    %v73 = vadd.f32 %v71, %v72
    %v74 = vsub.f32 %v51, %v63
    %v75 = vand.u32 2147483647, %v74
    %v76 = vrot.slane %v75, 4
    %v77 = vadd.f32 %v75, %v76
    %v78 = vrot.slane %v77, 2
    %v79 = vadd.f32 %v77, %v78
    %v80 = vrot.slane %v79, 1
    %v81 = vadd.f32 %v79, %v80
    %v82 = vrot.slane %v51, 4
    %v83 = vadd.f32 %v51, %v82
    %v84 = vrot.slane %v83, 2
    %v85 = vadd.f32 %v83, %v84
    %v86 = vrot.slane %v85, 1
    %v87 = vadd.f32 %v85, %v86
    %vm88 = vcmask 1040384
    %v89 = vsel %vm88, %v73, %v81
    %vm90 = vcmask 1041408
    %v91 = vsel %vm90, %v89, %v87
    %vm92 = vcmask 1042432
    %v93 = vsel %vm92, %v91, 0.0
    %v94 = vld [vmem:[#allocation2] sm:$0xff]
    %v95 = vadd.f32 %v94, %v93
    %96 = vst [vmem:[#allocation2] sm:$0xff] %v95
    // Predicated region
    $region26: #{tpu_custom_call.1} parent=1 // pred_check
      %p97 = pneg %p43
    $region27: #{tpu_custom_call.1} parent=1 // pred_check_branch
      %99 = sbr.rel (%p97) target = $region29
    $region28: #{tpu_custom_call.1} parent=1 // pred_region
      %v100 = vld [vmem:[#allocation2] sm:$0xff]
      %v101 = vld [vmem:[%s2] sm:$0x1]
      %102 = vrot.lane.b32.xlu0 %v100, 127
      %v103 = vpop.permute.xlu0 %102
      %v105 = vrot.slane %v100, 2
      %v107 = vsub.f32 %v103, %v105
      %v108 = vmul.f32 %v100, 0.001
      %v110 = vrot.slane %v108, 1
      %v112 = vsub.f32 %v107, %v110
      %vm113 = vcmp.lt.s32.totalorder %v57, 32
      %vm114 = vcmp.ge.s32.totalorder %v57, 7
      %vm115 = vmand %vm114, %vm113
      %v116 = vsel %vm113, %v112, 0.0
      %v117 = vsel %vm88, %v116, 0.0
      %118 = vadd.xlane.f32.xlu0 %v117
      %v119 = vpop.xlane.xlu0 %118
      %v120 = vrot.slane %v119, 4
      %v121 = vadd.f32 %v119, %v120
      %v122 = vrot.slane %v121, 2
      %v123 = vadd.f32 %v121, %v122
      %v124 = vrot.slane %v123, 1
      %v125 = vadd.f32 %v123, %v124
      %s126 = vtos %v125
      %v127 = vstv %s126
      %v128 = vmul.f32 %v127, 0.03125
      %v129 = vsub.f32 %v112, %v128
      %v130 = vmul.f32 %v129, %v129
      %v132 = vrot.slane %v130, 7
      %v134 = vsel %vm88, %v129, %v132
      %135 = vrot.lane.b32.xlu0 %v134, 1
      %v136 = vpop.permute.xlu0 %135
      %v137 = vadd.f32 %v134, %v136
      %138 = vrot.lane.b32.xlu0 %v137, 2
      %v139 = vpop.permute.xlu0 %138
      %v140 = vadd.f32 %v137, %v139
      %141 = vrot.lane.b32.xlu0 %v140, 4
      %v142 = vpop.permute.xlu0 %141
      %v143 = vadd.f32 %v140, %v142
      %v144 = vmul.f32 %v143, 0.125
      %v145 = vmul.f32 %v144, 8.0
      %v146 = vmul.f32 %v145, %v144
      %v148 = vrot.slane %v146, 7
      %v150 = vsub.f32 %v143, %v148
      %v151 = vmul.f32 %v150, 0.14285715
      %v152 = vmax.f32 %v151, 1e-12
      %v153 = vrsqrt.pop %v152
      %v154 = vmul.f32 %v153, %v152
      %v155 = vmul.f32 %v154, %v153
      %v156 = vmul.f32 0.5, %v155
      %v157 = vsub.f32 1.5, %v156
      %v158 = vmul.f32 %v153, %v157
      %vm159 = vweird.f32 %v152
      %vm160 = vweird.f32 %v153
      %vm161 = vmor %vm159, %vm160
      %v162 = vsel %vm161, %v153, %v158
      %v163 = vmul.f32 %v162, 0.009449112
      %v165 = vrot.slane %v163, 1
      %v167 = vmul.f32 %v112, %v165
      %v168 = vsel %vm115, 1.0, 0.0
      %v169 = vsel %vm113, 1.0, 0.0
      %v170 = vmul.f32 %v167, %v168
      %v171 = vmul.f32 %v101, %v168
      %v172 = vsub.f32 %v100, 1.0
      %v173 = vand.u32 2147483647, %v172
      %v174 = vmul.f32 %v173, %v169
      %v176 = vperm.slane %v171, 0
      %v178 = vsel %vm88, %v170, %v176
      %v179 = vsel %vm90, %v178, %v174
      %v180 = vsel %vm92, %v179, 0.0
      %181 = vadd.xlane.f32.xlu0 %v180
      %v182 = vpop.xlane.xlu0 %181
      %v183 = vmul.f32 %v182, 0.04
      %v184 = vmul.f32 %v182, 0.8
      %v185 = vsub.f32 %v167, %v183
      %v186 = vmul.f32 %v185, %v168
      %v188 = vperm.slane %v183, 1
      %v190 = vsub.f32 %v101, %v188
      %v191 = vmul.f32 %v190, %v168
      %v192 = vmul.f32 %v186, %v191
      %v193 = vmul.f32 %v186, %v186
      %v194 = vmul.f32 %v191, %v191
      %v196 = vrot.slane %v193, 7
      %v199 = vperm.slane %v194, 0
      %v201 = vsel %vm88, %v192, %v196
      %v202 = vsel %vm90, %v201, %v199
      %v203 = vsel %vm92, %v202, 0.0
      %204 = vadd.xlane.f32.xlu0 %v203
      %v205 = vpop.xlane.xlu0 %204
      %v207 = vrot.slane %v205, 1
      %v209 = vmul.f32 %v205, %v207
      %v210 = vadd.f32 %v209, 1e-20
      %v211 = vrsqrt.pop %v210
      %v212 = vmul.f32 %v211, %v210
      %v213 = vmul.f32 %v212, %v211
      %v214 = vmul.f32 0.5, %v213
      %v215 = vsub.f32 1.5, %v214
      %v216 = vmul.f32 %v211, %v215
      %vm217 = vweird.f32 %v210
      %vm218 = vweird.f32 %v211
      %vm219 = vmor %vm217, %vm218
      %v220 = vsel %vm219, %v211, %v216
      %v222 = vrot.slane %v220, 1
      %v224 = vmul.f32 %v205, %v222
      %v225 = vand.u32 2147483647, %v224
      %v226 = vmul.f32 %v183, -15.874508
      %v227 = vmul.f32 %v205, 0.041666668
      %v228 = vadd.f32 %v227, 1e-30
      %v229 = vrsqrt.pop %v228
      %v230 = vmul.f32 %v229, %v228
      %v231 = vmul.f32 %v230, %v229
      %v232 = vmul.f32 0.5, %v231
      %v233 = vsub.f32 1.5, %v232
      %v234 = vmul.f32 %v229, %v233
      %vm235 = vweird.f32 %v228
      %vm236 = vweird.f32 %v229
      %vm237 = vmor %vm235, %vm236
      %v238 = vsel %vm237, %v229, %v234
      %v240 = vrot.slane %v238, 1
      %v242 = vmul.f32 %v226, %v240
      %v243 = vmul.f32 %v225, 0.5
      %v244 = vadd.f32 %v242, %v243
      %v246 = vrot.slane %v184, 2
      %v248 = vadd.f32 %v244, %v246
      %vm249 = vcmask 0
      %250 = vst.msk [vmem:[#allocation8] sm:$0x1] %vm249, %v248
    $region29: #{tpu_custom_call.1} parent=1 // pred_fallthru
      _
    // Predicated region
    $region30: #{tpu_custom_call.1} parent=1 // pred_check
      _
    $region31: #{tpu_custom_call.1} parent=1 // pred_check_branch
      %252 = sbr.rel (0) target = $region33
    $region32: #{tpu_custom_call.1} parent=1 // pred_region
      %254 = vsyncadd [#allocation5], 0
      %s256 = sshll.u32 [#allocation8], 4
      %s257 = int_to_ptr.vmem [resolvable:$true] %s256
      %s258 = sshll.u32 %s3, 4
      %s259 = int_to_ptr.hbm [resolvable:$true] %s258
      %261 = dma.vmem_to_hbm [thread:$0]  %s257, 16, %s259, [#allocation5]
    $region33: #{tpu_custom_call.1} parent=1 // pred_fallthru
      _
    // Predicated region
    $region34: #{tpu_custom_call.1} parent=1 // pred_check
      _
    $region35: #{tpu_custom_call.1} parent=1 // pred_check_branch
      %263 = sbr.rel (0) target = $region37
    $region36: #{tpu_custom_call.1} parent=1 // pred_region
      %265 = dma.done [#allocation5], 16
    $region37: #{tpu_custom_call.1} parent=1 // pred_fallthru
      _
    %266 = vsyncpa [#allocation4], 1
    %267 = vsyncpa [#allocation7], 1
    %268 = vsyncpa [#allocation5], 1

</llo_original>
